<compile_context>
chip_gen: v7x
topology: tpu7x:2x2x1
jax: 0.10.0
libtpu: 0.0.40
codegen_flags: <defaults>
</compile_context>

<pallas_src>
import functools
import math

import jax
import jax.numpy as jnp
from jax.experimental import pallas as pl
from jax.experimental.pallas import tpu as pltpu


def _layernorm_kernel(x_ref, gamma_ref, beta_ref, o_ref, *, eps):
    # x_ref: (TILE_ROWS, D), gamma_ref/beta_ref: (1, D)
    x = x_ref[...].astype(jnp.float32)
    d = x.shape[-1]

    mean = jnp.mean(x, axis=-1, keepdims=True)
    centered = x - mean
    # torch.std default: unbiased (Bessel-corrected) estimator, divide by (N - 1).
    # TODO(synk): D == 1 yields inf/NaN here, matching torch.std's unbiased NaN behaviour.
    var = jnp.sum(centered * centered, axis=-1, keepdims=True) / jnp.float32(d - 1)
    std = jnp.sqrt(var)

    # One reciprocal per row on the EUP instead of a (TILE, D) broadcast divide
    # on the VALU.  approx=False keeps full precision vs. the reference; switch
    # to approx=True for an extra (free) EUP fast path if ~1 ulp drift is OK.
    inv = pl.reciprocal(std + jnp.float32(eps), approx=False)

    gamma = gamma_ref[...].astype(jnp.float32)
    beta = beta_ref[...].astype(jnp.float32)

    out = gamma * (centered * inv) + beta
    o_ref[...] = out.astype(o_ref.dtype)


# Pipeline VMEM budget for the x/out tiles.  Conservative enough to fit v7x's
# 64 MiB physical VMEM with double-buffering; raised above v5e's 16 MiB scoped
# default via vmem_limit_bytes below.
_VMEM_TILE_BUDGET = 32 * 1024 * 1024
_VMEM_LIMIT_BYTES = 48 * 1024 * 1024


def _choose_tile_rows(rows, d):
    """Largest row tile that keeps ~2x(in)+2x(out) f32 buffers under budget."""
    bytes_per_row = 4 * 4 * d  # 4 buffers (dbl-buffered in+out) x 4 bytes (f32)
    max_rows = max(_VMEM_TILE_BUDGET // bytes_per_row, 8)
    rows_rounded = -(-rows // 8) * 8
    tile = min(max_rows, 2048, rows_rounded)
    tile = max((tile // 8) * 8, 8)  # multiple of 8 sublanes (f32)
    return int(tile)


def layer_norm(x, gamma, beta, *, eps=1e-5, tile_rows=None):
    """LayerNorm over the last axis of x. x: (..., D); gamma, beta: (D,)."""
    orig_shape = x.shape
    d = orig_shape[-1]
    rows = math.prod(orig_shape[:-1]) if len(orig_shape) > 1 else 1

    x2 = x.reshape(rows, d)
    if tile_rows is None:
        tile_rows = _choose_tile_rows(rows, d)

    # Pad rows up to a tile multiple so any batch*seq works with the
    # performance-optimal tile size; padded rows are sliced off afterwards.
    padded_rows = -(-rows // tile_rows) * tile_rows
    if padded_rows != rows:
        x2 = jnp.pad(x2, ((0, padded_rows - rows), (0, 0)))

    gamma2 = gamma.reshape(1, d)
    beta2 = beta.reshape(1, d)

    kernel = functools.partial(_layernorm_kernel, eps=eps)

    out2 = pl.pallas_call(
        kernel,
        out_shape=jax.ShapeDtypeStruct((padded_rows, d), x.dtype),
        grid_spec=pltpu.PrefetchScalarGridSpec(
            num_scalar_prefetch=0,
            grid=(pl.cdiv(padded_rows, tile_rows),),
            in_specs=[
                pl.BlockSpec((tile_rows, d), lambda i: (i, 0)),
                pl.BlockSpec((1, d), lambda i: (0, 0)),  # gamma: resident
                pl.BlockSpec((1, d), lambda i: (0, 0)),  # beta: resident
            ],
            out_specs=pl.BlockSpec((tile_rows, d), lambda i: (i, 0)),
        ),
        compiler_params=pltpu.CompilerParams(
            dimension_semantics=("parallel",),
            vmem_limit_bytes=_VMEM_LIMIT_BYTES,
        ),
    )(x2, gamma2, beta2)

    if padded_rows != rows:
        out2 = out2[:rows]
    return out2.reshape(orig_shape)


if __name__ == "__main__":
    key = jax.random.PRNGKey(0)

    # Small, lane-dense demo shape (D multiple of 128 keeps stores unmasked).
    batch, seq, hidden = 2, 8, 128  # ndim = hidden = 128

    # Deterministic parameter init matching nn.Parameter(torch.ones/zeros(ndim)).
    gamma = jnp.ones((hidden,), dtype=jnp.float32)
    beta = jnp.zeros((hidden,), dtype=jnp.float32)

    x = jax.random.normal(key, (batch, seq, hidden), dtype=jnp.float32)

    out = layer_norm(x, gamma, beta, eps=1e-5)
    out = jax.block_until_ready(out)

    # Pure-JAX reference check (same math as the PyTorch forward).
    mean = jnp.mean(x, axis=-1, keepdims=True)
    std = jnp.sqrt(jnp.sum((x - mean) ** 2, axis=-1, keepdims=True) / (hidden - 1))
    ref = gamma * (x - mean) / (std + 1e-5) + beta

    assert out.shape == x.shape
    assert jnp.allclose(out, ref, atol=1e-5, rtol=1e-5)

    print("KERNEL_OK")
</pallas_src>

<mosaic_0001>
module attributes {stable_mosaic.version = 11 : i64} {
  func.func @_layernorm_kernel(%arg0: i32, %arg1: memref<16x128xf32, #tpu.memory_space<vmem>>, %arg2: memref<1x128xf32, #tpu.memory_space<vmem>>, %arg3: memref<1x128xf32, #tpu.memory_space<vmem>>, %arg4: memref<16x128xf32, #tpu.memory_space<vmem>>) attributes {dimension_semantics = [#tpu.dimension_semantics<parallel>], iteration_bounds = array<i64: 1>, scalar_prefetch = 0 : i64, scratch_operands = 0 : i64, tpu.core_type = #tpu.core_type<tc>, window_params = [{transform_indices = @transform_0, window_bounds = array<i64: 16, 128>}, {pipeline_mode = #tpu.pipeline_mode<synchronous>, transform_indices = @transform_1, window_bounds = array<i64: 1, 128>}, {pipeline_mode = #tpu.pipeline_mode<synchronous>, transform_indices = @transform_2, window_bounds = array<i64: 1, 128>}, {transform_indices = @transform_3, window_bounds = array<i64: 16, 128>}]} {
    %c0 = arith.constant 0 : index
    %c0_0 = arith.constant 0 : index
    %0 = vector.load %arg1[%c0, %c0_0] : memref<16x128xf32, #tpu.memory_space<vmem>>, vector<16x128xf32>
    %cst = arith.constant dense<0.000000e+00> : vector<16xf32>
    %1 = vector.multi_reduction <add>, %0, %cst [1] : vector<16x128xf32> to vector<16xf32>
    %2 = vector.shape_cast %1 : vector<16xf32> to vector<16x1xf32>
    %cst_1 = arith.constant 1.280000e+02 : f32
    %3 = vector.broadcast %cst_1 : f32 to vector<16x1xf32>
    %4 = arith.divf %2, %3 : vector<16x1xf32>
    %5 = vector.broadcast %4 : vector<16x1xf32> to vector<16x128xf32>
    %6 = arith.subf %0, %5 : vector<16x128xf32>
    %7 = arith.mulf %6, %6 : vector<16x128xf32>
    %cst_2 = arith.constant dense<0.000000e+00> : vector<16xf32>
    %8 = vector.multi_reduction <add>, %7, %cst_2 [1] : vector<16x128xf32> to vector<16xf32>
    %9 = vector.shape_cast %8 : vector<16xf32> to vector<16x1xf32>
    %cst_3 = arith.constant 1.270000e+02 : f32
    %10 = vector.broadcast %cst_3 : f32 to vector<16x1xf32>
    %11 = arith.divf %9, %10 : vector<16x1xf32>
    %12 = math.sqrt %11 : vector<16x1xf32>
    %cst_4 = arith.constant 9.99999974E-6 : f32
    %13 = vector.broadcast %cst_4 : f32 to vector<16x1xf32>
    %14 = arith.addf %12, %13 : vector<16x1xf32>
    %15 = tpu.reciprocal %14 : vector<16x1xf32> -> vector<16x1xf32>
    %c0_5 = arith.constant 0 : index
    %c0_6 = arith.constant 0 : index
    %16 = vector.load %arg2[%c0_5, %c0_6] : memref<1x128xf32, #tpu.memory_space<vmem>>, vector<1x128xf32>
    %c0_7 = arith.constant 0 : index
    %c0_8 = arith.constant 0 : index
    %17 = vector.load %arg3[%c0_7, %c0_8] : memref<1x128xf32, #tpu.memory_space<vmem>>, vector<1x128xf32>
    %18 = vector.broadcast %15 : vector<16x1xf32> to vector<16x128xf32>
    %19 = arith.mulf %6, %18 : vector<16x128xf32>
    %20 = vector.broadcast %16 : vector<1x128xf32> to vector<16x128xf32>
    %21 = arith.mulf %20, %19 : vector<16x128xf32>
    %22 = vector.broadcast %17 : vector<1x128xf32> to vector<16x128xf32>
    %23 = arith.addf %21, %22 : vector<16x128xf32>
    %c0_9 = arith.constant 0 : index
    %c0_10 = arith.constant 0 : index
    %24 = vector.load %arg4[%c0_9, %c0_10] : memref<16x128xf32, #tpu.memory_space<vmem>>, vector<16x128xf32>
    tpu.vector_store %arg4[%c0_9, %c0_10], %23 {strides = array<i32>} : memref<16x128xf32, #tpu.memory_space<vmem>>, vector<16x128xf32>,
    return
  }
  func.func @transform_0(%arg0: i32) -> (i32, i32) {
    %c0_i32 = arith.constant 0 : i32
    %c0_i32_0 = arith.constant 0 : i32
    return %arg0, %c0_i32 : i32, i32
  }
  func.func @transform_1(%arg0: i32) -> (i32, i32) {
    %c0_i32 = arith.constant 0 : i32
    %c0_i32_0 = arith.constant 0 : i32
    %c0_i32_1 = arith.constant 0 : i32
    return %c0_i32, %c0_i32_0 : i32, i32
  }
  func.func @transform_2(%arg0: i32) -> (i32, i32) {
    %c0_i32 = arith.constant 0 : i32
    %c0_i32_0 = arith.constant 0 : i32
    %c0_i32_1 = arith.constant 0 : i32
    return %c0_i32, %c0_i32_0 : i32, i32
  }
  func.func @transform_3(%arg0: i32) -> (i32, i32) {
    %c0_i32 = arith.constant 0 : i32
    %c0_i32_0 = arith.constant 0 : i32
    return %arg0, %c0_i32 : i32, i32
  }
}

</mosaic_0001>

<llo_original>
// kernel: tpu_custom_call.1
$region0: #{tpu_custom_call.1}
  #allocation0 [shape = 'u32[]', space=smem, size = 0x4, offset = 0x4, fixed_abs, tag = 'smem constant byte address 0x4 - core index']
  #allocation1 [shape = 'u32[144,128]{1,0:T(1,128)}', space=vmem, size = 0x12000, scoped, tag = 'internal scratch']
  %s0 = inlined_call_operand.hbm [shape: f32[16,128], index: 0, kind: input, shape index: {}]
  %s1 = inlined_call_operand.vmem [shape: f32[1,128], index: 1, kind: input, shape index: {}]
  %s2 = inlined_call_operand.vmem [shape: f32[1,128], index: 2, kind: input, shape index: {}]
  %s3 = inlined_call_operand.hbm [shape: f32[16,128], index: 3, kind: output, shape index: {}]
  %s4 = sld [smem:[#allocation0]]
  $region26: #{tpu_custom_call.1} parent=0
    _
  %s6 = ssub.s32 1, %s4
  %s7 = scalar_select 0, %s6, %s4
  $region1: #{tpu_custom_call.1} parent=0
    #allocation2 [shape = 'u8[8192]{0}', space=vmem, size = 0x2000, scoped, tag = 'input window, operand 0, single buffered']
    #allocation3 [shape = 's32[1]{0}', space=sflag, size = 0x4, scoped, tag = 'scoped memory for tpu_custom_call.1']
    #allocation4 [shape = 's32[1]{0}', space=sflag, size = 0x4, scoped, tag = 'scoped memory for tpu_custom_call.1']
    #allocation5 [shape = 'u8[8192]{0}', space=vmem, size = 0x2000, scoped, tag = 'output window, operand 0, single buffered']
    %8 = vsyncpa [#allocation3], 0
    %9 = vsyncpa [#allocation4], 0
    // Predicated region
    $region2: #{tpu_custom_call.1} parent=1 // pred_check
      _
    $region3: #{tpu_custom_call.1} parent=1 // pred_check_branch
      %11 = sbr.rel (0) target = $region5
    $region4: #{tpu_custom_call.1} parent=1 // pred_region
      %s13 = ssub.s32 256, 256
      %14 = vsyncadd [#allocation3], %s13
      %s15 = sshll.u32 [#allocation2], 4
      %s16 = int_to_ptr.vmem [resolvable:$true] %s15
      %21 = dma.hbm_to_vmem [thread:$0]  %s0, 256, %s16, [#allocation3], 128, 128, 8
    $region5: #{tpu_custom_call.1} parent=1 // pred_fallthru
      _
    // Predicated region
    $region6: #{tpu_custom_call.1} parent=1 // pred_check
      _
    $region7: #{tpu_custom_call.1} parent=1 // pred_check_branch
      %23 = sbr.rel (0) target = $region9
    $region8: #{tpu_custom_call.1} parent=1 // pred_region
      _
    $region9: #{tpu_custom_call.1} parent=1 // pred_fallthru
      _
    // Predicated region
    $region10: #{tpu_custom_call.1} parent=1 // pred_check
      _
    $region11: #{tpu_custom_call.1} parent=1 // pred_check_branch
      %25 = sbr.rel (0) target = $region13
    $region12: #{tpu_custom_call.1} parent=1 // pred_region
      _
    $region13: #{tpu_custom_call.1} parent=1 // pred_fallthru
      _
    // Predicated region
    $region14: #{tpu_custom_call.1} parent=1 // pred_check
      _
    $region15: #{tpu_custom_call.1} parent=1 // pred_check_branch
      %27 = sbr.rel (0) target = $region17
    $region16: #{tpu_custom_call.1} parent=1 // pred_region
      %28 = dma.done [#allocation3], 256
    $region17: #{tpu_custom_call.1} parent=1 // pred_fallthru
      _
    %v29 = vld [vmem:[#allocation2] sm:$0xff]
    %v30 = vld [vmem:[#allocation2 + $0x8] sm:$0xff]
    %31 = vadd.xlane.f32.xlu0 %v29
    %v32 = vpop.xlane.xlu0 %31
    %33 = vadd.xlane.f32.xlu0 %v30
    %v34 = vpop.xlane.xlu0 %33
    %v35 = vrcp.pop 128.0
    %v36 = vmul.f32 %v32, %v35
    %v37 = vmul.f32 %v34, %v35
    %v38 = vsub.f32 %v29, %v36
    %v39 = vsub.f32 %v30, %v37
    %v40 = vmul.f32 %v38, %v38
    %v41 = vmul.f32 %v39, %v39
    %42 = vadd.xlane.f32.xlu0 %v40
    %v43 = vpop.xlane.xlu0 %42
    %44 = vadd.xlane.f32.xlu0 %v41
    %v45 = vpop.xlane.xlu0 %44
    %v46 = vrcp.pop 127.0
    %v47 = vmul.f32 %v43, %v46
    %v48 = vmul.f32 %v45, %v46
    %v49 = vrsqrt.pop %v47
    %v50 = vmul.f32 %v47, %v49
    %vm51 = vcmp.eq.f32.partialorder %v47, inf
    %v52 = vsel %vm51, %v47, %v50
    %vm53 = vcmp.eq.f32.partialorder %v47, 0.0
    %v54 = vand.u32 %v47, 2147483648
    %v55 = vsel %vm53, %v54, %v52
    %v56 = vrsqrt.pop %v48
    %v57 = vmul.f32 %v48, %v56
    %vm58 = vcmp.eq.f32.partialorder %v48, inf
    %v59 = vsel %vm58, %v48, %v57
    %vm60 = vcmp.eq.f32.partialorder %v48, 0.0
    %v61 = vand.u32 %v48, 2147483648
    %v62 = vsel %vm60, %v61, %v59
    %v63 = vadd.f32 %v55, 1e-05
    %v64 = vadd.f32 %v62, 1e-05
    %v65 = vrcp.pop %v63
    %v66 = vrcp.pop %v64
    %v67 = vld [vmem:[%s1] sm:$0x1]
    %v68 = vld [vmem:[%s2] sm:$0x1]
    %v69 = vmul.f32 %v38, %v65
    %v70 = vmul.f32 %v39, %v66
    %v72 = vlaneseq
    %v73 = vshrl.u32 %v72, 7
    %v74 = vsub.s32 0, %v73
    %v75 = vrot.slane %v67, %v74
    %v77 = vmul.f32 %v75, %v69
    %v78 = vmul.f32 %v75, %v70
    %v80 = vlaneseq
    %v81 = vshrl.u32 %v80, 7
    %v82 = vsub.s32 0, %v81
    %v83 = vrot.slane %v68, %v82
    %v85 = vadd.f32 %v77, %v83
    %v86 = vadd.f32 %v78, %v83
    %87 = vst [vmem:[#allocation5] sm:$0xff] %v85
    %88 = vst [vmem:[#allocation5 + $0x8] sm:$0xff] %v86
    // Predicated region
    $region18: #{tpu_custom_call.1} parent=1 // pred_check
      _
    $region19: #{tpu_custom_call.1} parent=1 // pred_check_branch
      %90 = sbr.rel (0) target = $region21
    $region20: #{tpu_custom_call.1} parent=1 // pred_region
      %s92 = ssub.s32 256, 256
      %93 = vsyncadd [#allocation4], %s92
      %s94 = sshll.u32 [#allocation5], 4
      %s95 = int_to_ptr.vmem [resolvable:$true] %s94
      %100 = dma.vmem_to_hbm [thread:$0]  %s95, 256, %s3, [#allocation4], 128, 128, 8
    $region21: #{tpu_custom_call.1} parent=1 // pred_fallthru
      _
    // Predicated region
    $region22: #{tpu_custom_call.1} parent=1 // pred_check
      _
    $region23: #{tpu_custom_call.1} parent=1 // pred_check_branch
      %102 = sbr.rel (0) target = $region25
    $region24: #{tpu_custom_call.1} parent=1 // pred_region
      %103 = dma.done [#allocation4], 256
    $region25: #{tpu_custom_call.1} parent=1 // pred_fallthru
      _
    %104 = vsyncpa [#allocation3], 1
    %105 = vsyncpa [#allocation4], 1

</llo_original>
